<compile_context>
chip_gen: v7x
topology: tpu7x:2x2x1
jax: 0.10.0
libtpu: 0.0.40
codegen_flags: <defaults>
</compile_context>

<pallas_src>
import functools

import numpy as np
import jax
import jax.numpy as jnp
from jax import lax
from jax.experimental import pallas as pl
from jax.experimental.pallas import tpu as pltpu


# ----------------------------------------------------------------------------
# Pallas kernel: entire ShallowKey forward on pre-packed panels (4 MXU dots)
# ----------------------------------------------------------------------------
def shallowkey_kernel(panel_ref,   # (N*(W-1), H*C)  bf16, row = n*(W-1)+w, col = h*C+c
                      w1t_ref,     # (H*C, H*K)      bf16 Toeplitz conv1 weight (implicit H pad)
                      w2_ref,      # (H*K, 3*O2)     bf16 conv2, 3 H-shifted copies, 1/W folded in
                      w3_ref,      # (3*O2, 3*128)   bf16 block-diag 1x1 conv3, 1/25 folded in
                      consts_ref,  # (4, Wc)         f32: rows = b1t | b2fused | b3cat | c3
                      out_ref):    # (N, 128)        f32, lanes >= OUT are zero
    NWD = panel_ref.shape[0]          # N * (W-1)
    HK = w1t_ref.shape[1]             # H * K
    O2x3 = w2_ref.shape[1]            # 3 * O2
    G3 = w3_ref.shape[1]              # 3 * 128
    G = G3 // 3                       # 128 (padded OUT group width)
    N = out_ref.shape[0]
    WD = NWD // N                     # W - 1 pooled data columns per batch row

    b1t = consts_ref[0:1, :HK]        # conv1 bias tiled over H
    b2f = consts_ref[1:2, :O2x3]      # conv2 bias + folded relu(b1)/W pad-column term
    b3c = consts_ref[2:3, :G3]        # conv3 bias / 25, tiled over 3 lane groups
    c3 = consts_ref[3:4, :G]          # constant layer3 pixels (border + bias-only), / 25

    # ---- layer1: Conv2d(C, K, (3,1), pad=1) + ReLU for all (batch, width) rows
    #      as ONE Toeplitz matmul (H-shift structure lives in w1t).
    a1 = jnp.maximum(
        jnp.dot(panel_ref[...], w1t_ref[...],
                preferred_element_type=jnp.float32) + b1t, 0.0)          # (NWD, HK) f32

    # ---- AvgPool2d((1, W)): 0/1 selector built from iotas (exact in bf16),
    #      bf16 MXU dot sums the W-1 data columns per batch row.  The pooling
    #      window's left width-pad column (relu(b1)) and the 1/W scale are
    #      already folded into w2/b2f, so no epilogue here.
    row = lax.broadcasted_iota(jnp.int32, (N, NWD), 0)
    col = lax.broadcasted_iota(jnp.int32, (N, NWD), 1)
    sel = jnp.where((col >= row * WD) & (col < (row + 1) * WD),
                    1.0, 0.0).astype(jnp.bfloat16)
    psum = jnp.dot(sel, a1.astype(jnp.bfloat16),
                   preferred_element_type=jnp.float32)                   # (N, HK) f32

    # ---- layer2: Conv2d(K, O2, (H,1), pad=1) + ReLU, all 3 output rows at once.
    h2 = jnp.maximum(
        jnp.dot(psum.astype(jnp.bfloat16), w2_ref[...],
                preferred_element_type=jnp.float32) + b2f, 0.0)          # (N, 3*O2) f32

    # ---- layer3 (1x1 conv, pad=1) + ReLU on the three data pixels as ONE
    #      block-diagonal matmul; 1/25 global-mean scale folded into weights.
    y = jnp.maximum(
        jnp.dot(h2.astype(jnp.bfloat16), w3_ref[...],
                preferred_element_type=jnp.float32) + b3c, 0.0)          # (N, 3*G) f32

    # ---- global mean over the 5x5 layer3 output: 3 data pixels (lane-aligned
    #      slices) + precomputed constant for the 16 border + 6 bias-only pixels.
    out_ref[...] = y[:, 0:G] + y[:, G:2 * G] + y[:, 2 * G:3 * G] + c3


# ----------------------------------------------------------------------------
# One-time host-side repacking of the PyTorch OIHW weights into matmul panels
# ----------------------------------------------------------------------------
def shallowkey_pack_params(input_size, w1, b1, w2, b2, w3, b3):
    C, H, W = input_size
    LANE = 128

    w1_np = np.asarray(w1, np.float32)       # (K, C, 3, 1)
    w2_np = np.asarray(w2, np.float32)       # (O2, K, H, 1)
    w3_np = np.asarray(w3, np.float32)       # (OUT, O2, 1, 1)
    b1_np = np.asarray(b1, np.float32)
    b2_np = np.asarray(b2, np.float32)
    b3_np = np.asarray(b3, np.float32)

    K = w1_np.shape[0]
    O2 = w2_np.shape[0]
    OUT = w3_np.shape[0]
    assert w1_np.shape[1] == C and w2_np.shape[2] == H and OUT <= LANE

    # layer1 (3,1)-conv, pad=1, as a Toeplitz matrix over H (implicit zero pad):
    #   w1t[h_in*C + c, h_out*K + k] = w1[k, c, h_in - h_out + 1]
    w1t = np.zeros((H * C, H * K), np.float32)
    for h_out in range(H):
        for dh in range(3):
            h_in = h_out + dh - 1
            if 0 <= h_in < H:
                w1t[h_in * C:(h_in + 1) * C,
                    h_out * K:(h_out + 1) * K] = w1_np[:, :, dh, 0].T
    b1t = np.tile(b1_np, H)                                       # (H*K,)

    # layer2 ((H,1)-conv, pad=1) on the (H,1) pooled map: three output rows =
    # three H-shifted copies on the lanes.  Fold the AvgPool 1/W scale into the
    # weights and the pooled pad-column term relu(b1)/W into the bias.
    w2m = np.transpose(w2_np[:, :, :, 0], (2, 1, 0)).reshape(H * K, O2)   # row = h*K + k
    zK = np.zeros((K, O2), np.float32)
    w2cat = np.concatenate([np.concatenate([w2m[K:], zK], 0),     # oh = 0
                            w2m,                                  # oh = 1
                            np.concatenate([zK, w2m[:-K]], 0)],   # oh = 2
                           axis=1)                                # (H*K, 3*O2)
    w2s = w2cat * (1.0 / W)
    b2f = np.tile(b2_np, 3) + np.maximum(b1t, 0.0) @ w2s          # (3*O2,)

    # layer3 1x1 conv: block-diagonal weight, each OUT group padded to 128
    # lanes, global-mean 1/25 folded in (relu(x)/25 == relu(x/25)).
    w3m = w3_np[:, :, 0, 0].T                                     # (O2, OUT)
    w3ms = w3m * (1.0 / 25.0)
    b3s = b3_np * (1.0 / 25.0)
    G = LANE
    w3blk = np.zeros((3 * O2, 3 * G), np.float32)
    b3cat = np.zeros((3 * G,), np.float32)
    for g in range(3):
        w3blk[g * O2:(g + 1) * O2, g * G:g * G + OUT] = w3ms
        b3cat[g * G:g * G + OUT] = b3s

    # Constant layer3 pixels of its 5x5 output: 16 zero-pad border pixels plus
    # the 6 inner pixels fed only by layer2's width-pad columns (relu(b2)).
    relu_b2 = np.maximum(b2_np, 0.0)
    c3v = (16.0 * np.maximum(b3s, 0.0)
           + 6.0 * np.maximum(b3s + relu_b2 @ w3ms, 0.0))         # (OUT,)
    c3pad = np.zeros((G,), np.float32)
    c3pad[:OUT] = c3v

    # Concatenate the small f32 constants into one VMEM operand (static slices
    # in-kernel): row0 = b1t, row1 = b2fused, row2 = b3cat, row3 = c3.
    Wc = max(H * K, 3 * O2, 3 * G)
    Wc = ((Wc + LANE - 1) // LANE) * LANE
    consts = np.zeros((4, Wc), np.float32)
    consts[0, :H * K] = b1t
    consts[1, :3 * O2] = b2f
    consts[2, :3 * G] = b3cat
    consts[3, :G] = c3pad

    to_bf16 = lambda a: jnp.asarray(a).astype(jnp.bfloat16)
    return dict(w1t=to_bf16(w1t), w2cat=to_bf16(w2s), w3blk=to_bf16(w3blk),
                consts=jnp.asarray(consts, jnp.float32))


# ----------------------------------------------------------------------------
# Forward wrapper: minimal per-call activation packing + pallas_call
# ----------------------------------------------------------------------------
@functools.partial(jax.jit, static_argnames=("out_features",))
def shallowkey_forward(x, params, out_features):
    N, C, H, W = x.shape

    # AvgPool2d((1,W)) covers layer1-output columns 0..W-1: the left width-pad
    # column (bias-only -> folded into packed b2) plus input columns 0..W-2.
    # panel row = n*(W-1) + w, col = h*C + c.  allow_input_fusion lets XLA fuse
    # this transpose/slice/reshape/cast into the pallas_call's input.
    panel = (jnp.transpose(x, (0, 3, 2, 1))[:, :W - 1]
             .reshape(N * (W - 1), H * C).astype(jnp.bfloat16))

    G = params["w3blk"].shape[1] // 3          # 128 (lane-dense, padded OUT)

    out_padded = pl.pallas_call(
        shallowkey_kernel,
        out_shape=jax.ShapeDtypeStruct((N, G), jnp.float32),
        in_specs=[pl.BlockSpec(memory_space=pltpu.MemorySpace.VMEM)] * 5,
        out_specs=pl.BlockSpec(memory_space=pltpu.MemorySpace.VMEM),
        compiler_params=pltpu.CompilerParams(
            allow_input_fusion=[True, False, False, False, False]),
    )(panel, params["w1t"], params["w2cat"], params["w3blk"], params["consts"])

    return out_padded[:, :out_features]


# ----------------------------------------------------------------------------
# Pure-JAX reference (mirrors the PyTorch module in eval mode) for verification
# ----------------------------------------------------------------------------
def shallowkey_reference(x, w1, b1, w2, b2, w3, b3):
    dn = ('NCHW', 'OIHW', 'NCHW')
    Wd = x.shape[3]
    y = lax.conv_general_dilated(x, w1, (1, 1), ((1, 1), (1, 1)), dimension_numbers=dn)
    y = jnp.maximum(y + b1[None, :, None, None], 0.0)
    # AvgPool2d((1, W)) with default stride == kernel size, no padding
    y = lax.reduce_window(y, 0.0, lax.add, (1, 1, 1, Wd), (1, 1, 1, Wd), 'VALID') / Wd
    y = lax.conv_general_dilated(y, w2, (1, 1), ((1, 1), (1, 1)), dimension_numbers=dn)
    y = jnp.maximum(y + b2[None, :, None, None], 0.0)
    y = lax.conv_general_dilated(y, w3, (1, 1), ((1, 1), (1, 1)), dimension_numbers=dn)
    y = jnp.maximum(y + b3[None, :, None, None], 0.0)
    return y.mean(axis=(2, 3))


if __name__ == "__main__":
    # ShallowKey(input_size=(C, H, W), output_size=OUT, k=K, p_dropout=0.5), eval mode
    C, H, W = 4, 8, 16
    K = 2
    O2 = 64 * K
    OUT = 10
    N = 2

    key = jax.random.PRNGKey(0)
    ks = jax.random.split(key, 7)
    x  = jax.random.normal(ks[0], (N, C, H, W), jnp.float32)
    w1 = jax.random.normal(ks[1], (K, C, 3, 1), jnp.float32) * 0.1      # layer1: Conv2d(C, K, (3,1), pad=1)
    b1 = jax.random.normal(ks[2], (K,), jnp.float32) * 0.1
    w2 = jax.random.normal(ks[3], (O2, K, H, 1), jnp.float32) * 0.1     # layer2: Conv2d(K, 64K, (H,1), pad=1)
    b2 = jax.random.normal(ks[4], (O2,), jnp.float32) * 0.1
    w3 = jax.random.normal(ks[5], (OUT, O2, 1, 1), jnp.float32) * 0.1   # layer3: Conv2d(64K, OUT, 1, pad=1)
    b3 = jax.random.normal(ks[6], (OUT,), jnp.float32) * 0.1

    params = shallowkey_pack_params((C, H, W), w1, b1, w2, b2, w3, b3)  # once per model
    out = jax.block_until_ready(shallowkey_forward(x, params, out_features=OUT))
    ref = jax.block_until_ready(shallowkey_reference(x, w1, b1, w2, b2, w3, b3))

    assert out.shape == (N, OUT), out.shape
    max_err = float(jnp.max(jnp.abs(out - ref)))
    assert max_err < 1e-2, f"mismatch vs reference, max abs err = {max_err}"

    print("KERNEL_OK")
</pallas_src>

<mosaic_0001>
module attributes {stable_mosaic.version = 11 : i64} {
  func.func @shallowkey_kernel(%arg0: memref<30x32xbf16, #tpu.memory_space<vmem>>, %arg1: memref<32x16xbf16, #tpu.memory_space<vmem>>, %arg2: memref<16x384xbf16, #tpu.memory_space<vmem>>, %arg3: memref<384x384xbf16, #tpu.memory_space<vmem>>, %arg4: memref<4x384xf32, #tpu.memory_space<vmem>>, %arg5: memref<2x128xf32, #tpu.memory_space<vmem>>) attributes {dimension_semantics = [], scalar_prefetch = 0 : i64, scratch_operands = 0 : i64, tpu.core_type = #tpu.core_type<tc>} {
    %c0 = arith.constant 0 : index
    %c0_0 = arith.constant 0 : index
    %0 = vector.load %arg4[%c0, %c0_0] : memref<4x384xf32, #tpu.memory_space<vmem>>, vector<1x16xf32>
    %c1 = arith.constant 1 : index
    %c0_1 = arith.constant 0 : index
    %1 = vector.load %arg4[%c1, %c0_1] : memref<4x384xf32, #tpu.memory_space<vmem>>, vector<1x384xf32>
    %c2 = arith.constant 2 : index
    %c0_2 = arith.constant 0 : index
    %2 = vector.load %arg4[%c2, %c0_2] : memref<4x384xf32, #tpu.memory_space<vmem>>, vector<1x384xf32>
    %c3 = arith.constant 3 : index
    %c0_3 = arith.constant 0 : index
    %3 = vector.load %arg4[%c3, %c0_3] : memref<4x384xf32, #tpu.memory_space<vmem>>, vector<1x128xf32>
    %c0_4 = arith.constant 0 : index
    %c0_5 = arith.constant 0 : index
    %4 = vector.load %arg0[%c0_4, %c0_5] : memref<30x32xbf16, #tpu.memory_space<vmem>>, vector<30x32xbf16>
    %c0_6 = arith.constant 0 : index
    %c0_7 = arith.constant 0 : index
    %5 = vector.load %arg1[%c0_6, %c0_7] : memref<32x16xbf16, #tpu.memory_space<vmem>>, vector<32x16xbf16>
    %cst = arith.constant dense<0.000000e+00> : vector<30x16xf32>
    %6 = tpu.matmul %4, %5, %cst {dimension_numbers = #tpu.dot_dimension_numbers<[1], [0], [0], [1], [0, 0, 1, 1], [], []>} : vector<30x32xbf16>, vector<32x16xbf16>, vector<30x16xf32> -> vector<30x16xf32>
    %7 = vector.broadcast %0 : vector<1x16xf32> to vector<30x16xf32>
    %8 = arith.addf %6, %7 : vector<30x16xf32>
    %cst_8 = arith.constant 0.000000e+00 : f32
    %9 = vector.broadcast %cst_8 : f32 to vector<30x16xf32>
    %10 = arith.maximumf %8, %9 : vector<30x16xf32>
    %11 = tpu.iota {dimensions = array<i32: 0>} : vector<2x30xi32>
    %12 = tpu.iota {dimensions = array<i32: 1>} : vector<2x30xi32>
    %c15_i32 = arith.constant 15 : i32
    %13 = vector.broadcast %c15_i32 : i32 to vector<2x30xi32>
    %14 = arith.muli %11, %13 : vector<2x30xi32>
    %15 = arith.cmpi sge, %12, %14 : vector<2x30xi32>
    %c1_i32 = arith.constant 1 : i32
    %16 = vector.broadcast %c1_i32 : i32 to vector<2x30xi32>
    %17 = arith.addi %11, %16 : vector<2x30xi32>
    %c15_i32_9 = arith.constant 15 : i32
    %18 = vector.broadcast %c15_i32_9 : i32 to vector<2x30xi32>
    %19 = arith.muli %17, %18 : vector<2x30xi32>
    %20 = arith.cmpi slt, %12, %19 : vector<2x30xi32>
    %21 = arith.andi %15, %20 : vector<2x30xi1>
    %cst_10 = arith.constant 1.000000e+00 : f32
    %cst_11 = arith.constant 0.000000e+00 : f32
    %22 = vector.broadcast %cst_10 : f32 to vector<2x30xf32>
    %23 = vector.broadcast %cst_11 : f32 to vector<2x30xf32>
    %24 = arith.select %21, %22, %23 : vector<2x30xi1>, vector<2x30xf32>
    %25 = arith.truncf %24 : vector<2x30xf32> to vector<2x30xbf16>
    %26 = arith.truncf %10 : vector<30x16xf32> to vector<30x16xbf16>
    %cst_12 = arith.constant dense<0.000000e+00> : vector<2x16xf32>
    %27 = tpu.matmul %25, %26, %cst_12 {dimension_numbers = #tpu.dot_dimension_numbers<[1], [0], [0], [1], [0, 0, 1, 1], [], []>} : vector<2x30xbf16>, vector<30x16xbf16>, vector<2x16xf32> -> vector<2x16xf32>
    %28 = arith.truncf %27 : vector<2x16xf32> to vector<2x16xbf16>
    %c0_13 = arith.constant 0 : index
    %c0_14 = arith.constant 0 : index
    %29 = vector.load %arg2[%c0_13, %c0_14] : memref<16x384xbf16, #tpu.memory_space<vmem>>, vector<16x384xbf16>
    %cst_15 = arith.constant dense<0.000000e+00> : vector<2x384xf32>
    %30 = tpu.matmul %28, %29, %cst_15 {dimension_numbers = #tpu.dot_dimension_numbers<[1], [0], [0], [1], [0, 0, 1, 1], [], []>} : vector<2x16xbf16>, vector<16x384xbf16>, vector<2x384xf32> -> vector<2x384xf32>
    %31 = vector.broadcast %1 : vector<1x384xf32> to vector<2x384xf32>
    %32 = arith.addf %30, %31 : vector<2x384xf32>
    %cst_16 = arith.constant 0.000000e+00 : f32
    %33 = vector.broadcast %cst_16 : f32 to vector<2x384xf32>
    %34 = arith.maximumf %32, %33 : vector<2x384xf32>
    %35 = arith.truncf %34 : vector<2x384xf32> to vector<2x384xbf16>
    %c0_17 = arith.constant 0 : index
    %c0_18 = arith.constant 0 : index
    %36 = vector.load %arg3[%c0_17, %c0_18] : memref<384x384xbf16, #tpu.memory_space<vmem>>, vector<384x384xbf16>
    %cst_19 = arith.constant dense<0.000000e+00> : vector<2x384xf32>
    %37 = tpu.matmul %35, %36, %cst_19 {dimension_numbers = #tpu.dot_dimension_numbers<[1], [0], [0], [1], [0, 0, 1, 1], [], []>} : vector<2x384xbf16>, vector<384x384xbf16>, vector<2x384xf32> -> vector<2x384xf32>
    %38 = vector.broadcast %2 : vector<1x384xf32> to vector<2x384xf32>
    %39 = arith.addf %37, %38 : vector<2x384xf32>
    %cst_20 = arith.constant 0.000000e+00 : f32
    %40 = vector.broadcast %cst_20 : f32 to vector<2x384xf32>
    %41 = arith.maximumf %39, %40 : vector<2x384xf32>
    %42 = vector.extract_strided_slice %41 {offsets = [0, 0], sizes = [2, 128], strides = [1, 1]} : vector<2x384xf32> to vector<2x128xf32>
    %43 = vector.extract_strided_slice %41 {offsets = [0, 128], sizes = [2, 128], strides = [1, 1]} : vector<2x384xf32> to vector<2x128xf32>
    %44 = arith.addf %42, %43 : vector<2x128xf32>
    %45 = vector.extract_strided_slice %41 {offsets = [0, 256], sizes = [2, 128], strides = [1, 1]} : vector<2x384xf32> to vector<2x128xf32>
    %46 = arith.addf %44, %45 : vector<2x128xf32>
    %47 = vector.broadcast %3 : vector<1x128xf32> to vector<2x128xf32>
    %48 = arith.addf %46, %47 : vector<2x128xf32>
    %c0_21 = arith.constant 0 : index
    %c0_22 = arith.constant 0 : index
    %49 = vector.load %arg5[%c0_21, %c0_22] : memref<2x128xf32, #tpu.memory_space<vmem>>, vector<2x128xf32>
    tpu.vector_store %arg5[%c0_21, %c0_22], %48 {strides = array<i32>} : memref<2x128xf32, #tpu.memory_space<vmem>>, vector<2x128xf32>,
    return
  }
}

</mosaic_0001>

<llo_original>
// kernel: shallowkey_forward.1
$region0: #{shallowkey_forward.1}
  #allocation0 [shape = 'u32[]', space=smem, size = 0x4, offset = 0x4, fixed_abs, tag = 'smem constant byte address 0x4 - core index']
  #allocation1 [shape = 'u32[144,128]{1,0:T(1,128)}', space=vmem, size = 0x12000, scoped, tag = 'internal scratch']
  %s0 = inlined_call_operand.vmem [shape: bf16[30,32], index: 0, kind: input, shape index: {}]
  %s1 = inlined_call_operand.vmem [shape: bf16[32,16], index: 1, kind: input, shape index: {}]
  %s2 = inlined_call_operand.vmem [shape: bf16[16,384], index: 2, kind: input, shape index: {}]
  %s3 = inlined_call_operand.hbm [shape: bf16[384,384], index: 3, kind: input, shape index: {}]
  %s4 = inlined_call_operand.vmem [shape: f32[4,384], index: 4, kind: input, shape index: {}]
  %s5 = inlined_call_operand.hbm [shape: f32[2,128], index: 5, kind: output, shape index: {}]
  %s6 = sld [smem:[#allocation0]]
  $region34: #{shallowkey_forward.1} parent=0
    _
  %s8 = ssub.s32 1, %s6
  %s9 = scalar_select 0, %s8, %s6
  $region1: #{shallowkey_forward.1} parent=0
    #allocation2 [shape = 'u8[294912]{0}', space=vmem, size = 0x48000, scoped, tag = 'input window, operand 3, single buffered']
    #allocation3 [shape = 's32[1]{0}', space=sflag, size = 0x4, scoped, tag = 'scoped memory for shallowkey_forward.1']
    #allocation4 [shape = 's32[1]{0}', space=sflag, size = 0x4, scoped, tag = 'scoped memory for shallowkey_forward.1']
    #allocation5 [shape = 'u8[1024]{0}', space=vmem, size = 0x400, scoped, tag = 'output window, operand 0, single buffered']
    %10 = vsyncpa [#allocation3], 0
    %11 = vsyncpa [#allocation4], 0
    // Predicated region
    $region2: #{shallowkey_forward.1} parent=1 // pred_check
      _
    $region3: #{shallowkey_forward.1} parent=1 // pred_check_branch
      %13 = sbr.rel (0) target = $region5
    $region4: #{shallowkey_forward.1} parent=1 // pred_region
      _
    $region5: #{shallowkey_forward.1} parent=1 // pred_fallthru
      _
    // Predicated region
    $region6: #{shallowkey_forward.1} parent=1 // pred_check
      _
    $region7: #{shallowkey_forward.1} parent=1 // pred_check_branch
      %15 = sbr.rel (0) target = $region9
    $region8: #{shallowkey_forward.1} parent=1 // pred_region
      _
    $region9: #{shallowkey_forward.1} parent=1 // pred_fallthru
      _
    // Predicated region
    $region10: #{shallowkey_forward.1} parent=1 // pred_check
      _
    $region11: #{shallowkey_forward.1} parent=1 // pred_check_branch
      %17 = sbr.rel (0) target = $region13
    $region12: #{shallowkey_forward.1} parent=1 // pred_region
      _
    $region13: #{shallowkey_forward.1} parent=1 // pred_fallthru
      _
    // Predicated region
    $region14: #{shallowkey_forward.1} parent=1 // pred_check
      _
    $region15: #{shallowkey_forward.1} parent=1 // pred_check_branch
      %19 = sbr.rel (0) target = $region17
    $region16: #{shallowkey_forward.1} parent=1 // pred_region
      %s21 = ssub.s32 9216, 9216
      %22 = vsyncadd [#allocation3], %s21
      %s23 = sshll.u32 [#allocation2], 4
      %s24 = int_to_ptr.vmem [resolvable:$true] %s23
      %29 = dma.hbm_to_vmem [thread:$0]  %s3, 9216, %s24, [#allocation3], 192, 192, 12
    $region17: #{shallowkey_forward.1} parent=1 // pred_fallthru
      _
    // Predicated region
    $region18: #{shallowkey_forward.1} parent=1 // pred_check
      _
    $region19: #{shallowkey_forward.1} parent=1 // pred_check_branch
      %31 = sbr.rel (0) target = $region21
    $region20: #{shallowkey_forward.1} parent=1 // pred_region
      _
    $region21: #{shallowkey_forward.1} parent=1 // pred_fallthru
      _
    // Predicated region
    $region22: #{shallowkey_forward.1} parent=1 // pred_check
      _
    $region23: #{shallowkey_forward.1} parent=1 // pred_check_branch
      %33 = sbr.rel (0) target = $region25
    $region24: #{shallowkey_forward.1} parent=1 // pred_region
      %34 = dma.done [#allocation3], 9216
    $region25: #{shallowkey_forward.1} parent=1 // pred_fallthru
      _
    %v36 = vld [vmem:[%s4] sm:$0x1]
    %s37 = scalar_lea.vmem %s4, 1
    %v38 = vld [vmem:[%s37] ss:$4 sm:$0x7]
    %s39 = scalar_lea.vmem %s4, 2
    %v40 = vld [vmem:[%s39] ss:$4 sm:$0x7]
    %v41 = vld [vmem:[%s4 + $0x3] sm:$0x1]
    %v42 = vld [vmem:[%s0] sm:$0xf]
    %v43 = vld [vmem:[%s0 + $0x4] sm:$0xf]
    %v44 = vld [vmem:[%s0 + $0x8] sm:$0xf]
    %v45 = vld [vmem:[%s0 + $0xc] sm:$0x7]
    %v46 = vld [vmem:[%s1] sm:$0xf]
    %v47 = vld [vmem:[%s1 + $0x4] sm:$0xf]
    %v48 = vld [vmem:[%s1 + $0x8] sm:$0xf]
    %v49 = vld [vmem:[%s1 + $0xc] sm:$0xf]
    %v50 = vlaneseq
    %v51 = vshrl.u32 %v50, 7
    %v52 = vsub.s32 0, %v51
    %v53 = vrot.slane %v36, %v52
    %v58 = vunpack.c.l.b16 %v42
    %v59 = vunpack.c.l.b16 %v43
    %v60 = vunpack.c.l.b16 %v44
    %v61 = vunpack.c.l.b16 %v45
    %v62 = vpack.c.b16 %v59, %v58
    %v63 = vpack.c.b16 %v61, %v60
    %v68 = vunpack.c.l.b16 %v46
    %v69 = vunpack.c.l.b16 %v47
    %v70 = vunpack.c.l.b16 %v48
    %v71 = vunpack.c.l.b16 %v49
    %v72 = vpack.c.b16 %v69, %v68
    %v73 = vpack.c.b16 %v71, %v70
    %vm76 = vcmask 261120
    %v78 = vsel %vm76, %v62, 0
    %v81 = vsel %vm76, %v63, 0
    %83 = vmatprep.subr.bf16.mxu0 0
    %84 = vmatpush1.bf16.msra.mxu0 %v72
    %85 = vmatprep.subr.bf16.mxu0 0
    %86 = vmatpush1.bf16.msra.mxu0 %v73
    %87 = vmatprep.subr.bf16.mxu0 0
    %88 = vmatpush1.bf16.msra.mxu0 0
    %89 = vmatprep.subr.bf16.mxu0 0
    %90 = vmatpush1.bf16.msra.mxu0 0
    %91 = vmatprep.subr.bf16.mxu0 0
    %92 = vmatpush1.bf16.msra.mxu0 0
    %93 = vmatprep.subr.bf16.mxu0 0
    %94 = vmatpush1.bf16.msra.mxu0 0
    %95 = vmatprep.subr.bf16.mxu0 0
    %96 = vmatpush1.bf16.msra.mxu0 0
    %97 = vmatprep.subr.bf16.mxu0 0
    %98 = vmatpush1.bf16.msra.mxu0 0
    %99 = vmatprep.subr.bf16.mxu0 0
    %100 = vmatpush1.bf16.msra.mxu0 0
    %101 = vmatprep.subr.bf16.mxu0 0
    %102 = vmatpush1.bf16.msra.mxu0 0
    %103 = vmatprep.subr.bf16.mxu0 0
    %104 = vmatpush1.bf16.msra.mxu0 0
    %105 = vmatprep.subr.bf16.mxu0 0
    %106 = vmatpush1.bf16.msra.mxu0 0
    %107 = vmatprep.subr.bf16.mxu0 0
    %108 = vmatpush1.bf16.msra.mxu0 0
    %109 = vmatprep.subr.bf16.mxu0 0
    %110 = vmatpush1.bf16.msra.mxu0 0
    %111 = vmatprep.subr.bf16.mxu0 0
    %112 = vmatpush1.bf16.msra.mxu0 0
    %113 = vmatprep.subr.bf16.mxu0 0
    %114 = vmatpush1.bf16.msra.mxu0 0
    %115 = vmatprep.mubr.bf16.mxu0 0
    %116 = vmatmul.mubr.bf16.gmra.mrb[0].mxu0 %v78
    %v117 = vpop.f32.mrb[0].mxu0
    %v118 = vadd.f32 %v53, %v117
    %v119 = vpop.f32.mrb[0].mxu0
    %v120 = vpop.f32.mrb[0].mxu0
    %v121 = vadd.f32 %v53, %v120
    %v122 = vpop.f32.mrb[0].mxu0
    %123 = vmatprep.mubr.bf16.mxu0 0
    %124 = vmatmul.mubr.bf16.gmra.mrb[0].mxu0 %v81
    %v125 = vpop.f32.mrb[0].mxu0
    %v126 = vadd.f32 %v53, %v125
    %v127 = vpop.f32.mrb[0].mxu0
    %v128 = vpop.f32.mrb[0].mxu0
    %v129 = vadd.f32 %v53, %v128
    %v130 = vpop.f32.mrb[0].mxu0
    %131 = vdwg.mxu0
    %v132 = vmax.f32 %v118, 0.0
    %v133 = vmax.f32 %v121, 0.0
    %v134 = vmax.f32 %v126, 0.0
    %v135 = vmax.f32 %v129, 0.0
    %v136 = vlaneseq
    %v137 = vshrl.u32 %v136, 7
    %v138 = vlaneseq
    %v139 = vand.u32 %v138, 127
    %v140 = vmul.u32 %v137, 15
    %vm141 = vcmp.ge.s32.totalorder %v139, %v140
    %v142 = vadd.s32 %v137, 1
    %v143 = vmul.u32 %v142, 15
    %vm144 = vcmp.lt.s32.totalorder %v139, %v143
    %vm145 = vmand %vm141, %vm144
    %v146 = vsel %vm145, 1.0, 0.0
    %v147 = vpack.c.bf16 %v146, %v146
    %v148 = vpack.c.bf16 %v133, %v132
    %v149 = vpack.c.bf16 %v135, %v134
    %vm150 = vcmask 244736
    %v152 = vsel %vm150, %v147, 0
    %vm154 = vcmask 1046528
    %v156 = vsel %vm154, %v149, 0
    %158 = vmatprep.subr.bf16.mxu0 0
    %159 = vmatpush1.bf16.msra.mxu0 %v148
    %160 = vmatprep.subr.bf16.mxu0 0
    %161 = vmatpush1.bf16.msra.mxu0 %v156
    %162 = vmatprep.subr.bf16.mxu0 0
    %163 = vmatpush1.bf16.msra.mxu0 0
    %164 = vmatprep.subr.bf16.mxu0 0
    %165 = vmatpush1.bf16.msra.mxu0 0
    %166 = vmatprep.subr.bf16.mxu0 0
    %167 = vmatpush1.bf16.msra.mxu0 0
    %168 = vmatprep.subr.bf16.mxu0 0
    %169 = vmatpush1.bf16.msra.mxu0 0
    %170 = vmatprep.subr.bf16.mxu0 0
    %171 = vmatpush1.bf16.msra.mxu0 0
    %172 = vmatprep.subr.bf16.mxu0 0
    %173 = vmatpush1.bf16.msra.mxu0 0
    %174 = vmatprep.subr.bf16.mxu0 0
    %175 = vmatpush1.bf16.msra.mxu0 0
    %176 = vmatprep.subr.bf16.mxu0 0
    %177 = vmatpush1.bf16.msra.mxu0 0
    %178 = vmatprep.subr.bf16.mxu0 0
    %179 = vmatpush1.bf16.msra.mxu0 0
    %180 = vmatprep.subr.bf16.mxu0 0
    %181 = vmatpush1.bf16.msra.mxu0 0
    %182 = vmatprep.subr.bf16.mxu0 0
    %183 = vmatpush1.bf16.msra.mxu0 0
    %184 = vmatprep.subr.bf16.mxu0 0
    %185 = vmatpush1.bf16.msra.mxu0 0
    %186 = vmatprep.subr.bf16.mxu0 0
    %187 = vmatpush1.bf16.msra.mxu0 0
    %188 = vmatprep.subr.bf16.mxu0 0
    %189 = vmatpush1.bf16.msra.mxu0 0
    %190 = vmatprep.mubr.bf16.mxu0 0
    %191 = vmatmul.mubr.bf16.gmra.mrb[0].mxu0 %v152
    %v192 = vpop.f32.mrb[0].mxu0
    %v193 = vadd.f32 0.0, %v192
    %v194 = vpop.f32.mrb[0].mxu0
    %v195 = vpop.f32.mrb[0].mxu0
    %v196 = vpop.f32.mrb[0].mxu0
    %197 = vdwg.mxu0
    %v198 = vpack.c.bf16 %v193, %v193
    %v199 = vld [vmem:[%s2] sm:$0xff]
    %v200 = vld [vmem:[%s2 + $0x8] sm:$0xf]
    %v201 = vld [vmem:[%s2 + $0xc] sm:$0xff]
    %v202 = vld [vmem:[%s2 + $0x14] sm:$0xf]
    %v204 = vlaneseq
    %v205 = vshrl.u32 %v204, 7
    %v206 = vsub.s32 0, %v205
    %v207 = vrot.slane %v38, %v206
    %v208 = vlaneseq
    %v209 = vshrl.u32 %v208, 7
    %v210 = vsub.s32 1, %v209
    %v211 = vrot.slane %v38, %v210
    %v212 = vlaneseq
    %v213 = vshrl.u32 %v212, 7
    %v214 = vsub.s32 2, %v213
    %v215 = vrot.slane %v38, %v214
    %v223 = vunpack.c.l.b16 %v199
    %v224 = vunpack.c.h.b16 %v199
    %v225 = vunpack.c.l.b16 %v200
    %v226 = vunpack.c.l.b16 %v201
    %v227 = vunpack.c.h.b16 %v201
    %v228 = vunpack.c.l.b16 %v202
    %v229 = vpack.c.b16 %v226, %v223
    %v230 = vpack.c.b16 %v227, %v224
    %v231 = vpack.c.b16 %v228, %v225
    %vm235 = vcmask 130048
    %v237 = vsel %vm235, %v198, 0
    %239 = vmatprep.subr.bf16.mxu0 %v230
    %240 = vmatpush1.bf16.msra.mxu0 %v229
    %241 = vmatprep.subr.bf16.mxu0 0
    %242 = vmatpush1.bf16.msra.mxu0 0
    %243 = vmatprep.subr.bf16.mxu0 0
    %244 = vmatpush1.bf16.msra.mxu0 0
    %245 = vmatprep.subr.bf16.mxu0 0
    %246 = vmatpush1.bf16.msra.mxu0 0
    %247 = vmatprep.subr.bf16.mxu0 0
    %248 = vmatpush1.bf16.msra.mxu0 0
    %249 = vmatprep.subr.bf16.mxu0 0
    %250 = vmatpush1.bf16.msra.mxu0 0
    %251 = vmatprep.subr.bf16.mxu0 0
    %252 = vmatpush1.bf16.msra.mxu0 0
    %253 = vmatprep.subr.bf16.mxu0 0
    %254 = vmatpush1.bf16.msra.mxu0 0
    %255 = vmatprep.subr.bf16.mxu0 0
    %256 = vmatpush1.bf16.msra.mxu0 0
    %257 = vmatprep.subr.bf16.mxu0 0
    %258 = vmatpush1.bf16.msra.mxu0 0
    %259 = vmatprep.subr.bf16.mxu0 0
    %260 = vmatpush1.bf16.msra.mxu0 0
    %261 = vmatprep.subr.bf16.mxu0 0
    %262 = vmatpush1.bf16.msra.mxu0 0
    %263 = vmatprep.subr.bf16.mxu0 0
    %264 = vmatpush1.bf16.msra.mxu0 0
    %265 = vmatprep.subr.bf16.mxu0 0
    %266 = vmatpush1.bf16.msra.mxu0 0
    %267 = vmatprep.subr.bf16.mxu0 0
    %268 = vmatpush1.bf16.msra.mxu0 0
    %269 = vmatprep.subr.bf16.mxu0 0
    %270 = vmatpush1.bf16.msra.mxu0 0
    %271 = vmatprep.mubr.bf16.mxu0 0
    %272 = vmatmul.mubr.bf16.gmra.mrb[0].mxu0 %v237
    %v273 = vpop.f32.mrb[0].mxu0
    %v274 = vadd.f32 %v207, %v273
    %v275 = vpop.f32.mrb[0].mxu0
    %v276 = vadd.f32 %v211, %v275
    %v277 = vpop.f32.mrb[0].mxu0
    %v278 = vpop.f32.mrb[0].mxu0
    %279 = vdwg.mxu0
    %280 = vmatprep.subr.bf16.mxu0 0
    %281 = vmatpush1.bf16.msra.mxu0 %v231
    %282 = vmatprep.subr.bf16.mxu0 0
    %283 = vmatpush1.bf16.msra.mxu0 0
    %284 = vmatprep.subr.bf16.mxu0 0
    %285 = vmatpush1.bf16.msra.mxu0 0
    %286 = vmatprep.subr.bf16.mxu0 0
    %287 = vmatpush1.bf16.msra.mxu0 0
    %288 = vmatprep.subr.bf16.mxu0 0
    %289 = vmatpush1.bf16.msra.mxu0 0
    %290 = vmatprep.subr.bf16.mxu0 0
    %291 = vmatpush1.bf16.msra.mxu0 0
    %292 = vmatprep.subr.bf16.mxu0 0
    %293 = vmatpush1.bf16.msra.mxu0 0
    %294 = vmatprep.subr.bf16.mxu0 0
    %295 = vmatpush1.bf16.msra.mxu0 0
    %296 = vmatprep.subr.bf16.mxu0 0
    %297 = vmatpush1.bf16.msra.mxu0 0
    %298 = vmatprep.subr.bf16.mxu0 0
    %299 = vmatpush1.bf16.msra.mxu0 0
    %300 = vmatprep.subr.bf16.mxu0 0
    %301 = vmatpush1.bf16.msra.mxu0 0
    %302 = vmatprep.subr.bf16.mxu0 0
    %303 = vmatpush1.bf16.msra.mxu0 0
    %304 = vmatprep.subr.bf16.mxu0 0
    %305 = vmatpush1.bf16.msra.mxu0 0
    %306 = vmatprep.subr.bf16.mxu0 0
    %307 = vmatpush1.bf16.msra.mxu0 0
    %308 = vmatprep.subr.bf16.mxu0 0
    %309 = vmatpush1.bf16.msra.mxu0 0
    %310 = vmatprep.subr.bf16.mxu0 0
    %311 = vmatpush1.bf16.msra.mxu0 0
    %312 = vmatprep.mubr.bf16.mxu0 0
    %313 = vmatmul.mubr.bf16.gmra.mrb[0].mxu0 %v237
    %v314 = vpop.f32.mrb[0].mxu0
    %v315 = vadd.f32 %v215, %v314
    %v316 = vpop.f32.mrb[0].mxu0
    %v317 = vpop.f32.mrb[0].mxu0
    %v318 = vpop.f32.mrb[0].mxu0
    %319 = vdwg.mxu0
    %v320 = vmax.f32 %v274, 0.0
    %v321 = vmax.f32 %v276, 0.0
    %v322 = vmax.f32 %v315, 0.0
    %v323 = vpack.c.bf16 %v320, %v320
    %v324 = vpack.c.bf16 %v321, %v321
    %v325 = vpack.c.bf16 %v322, %v322
    %v326 = vld [vmem:[#allocation2] sm:$0xff]
    %v327 = vld [vmem:[#allocation2 + $0x8] sm:$0xf]
    %v328 = vld [vmem:[#allocation2 + $0xc] sm:$0xff]
    %v329 = vld [vmem:[#allocation2 + $0x14] sm:$0xf]
    %v330 = vld [vmem:[#allocation2 + $0x18] sm:$0xff]
    %v331 = vld [vmem:[#allocation2 + $0x20] sm:$0xf]
    %v332 = vld [vmem:[#allocation2 + $0x24] sm:$0xff]
    %v333 = vld [vmem:[#allocation2 + $0x2c] sm:$0xf]
    %v334 = vld [vmem:[#allocation2 + $0x30] sm:$0xff]
    %v335 = vld [vmem:[#allocation2 + $0x38] sm:$0xf]
    %v336 = vld [vmem:[#allocation2 + $0x3c] sm:$0xff]
    %v337 = vld [vmem:[#allocation2 + $0x44] sm:$0xf]
    %v338 = vld [vmem:[#allocation2 + $0x48] sm:$0xff]
    %v339 = vld [vmem:[#allocation2 + $0x50] sm:$0xf]
    %v340 = vld [vmem:[#allocation2 + $0x54] sm:$0xff]
    %v341 = vld [vmem:[#allocation2 + $0x5c] sm:$0xf]
    %v342 = vld [vmem:[#allocation2 + $0x60] sm:$0xff]
    %v343 = vld [vmem:[#allocation2 + $0x68] sm:$0xf]
    %v344 = vld [vmem:[#allocation2 + $0x6c] sm:$0xff]
    %v345 = vld [vmem:[#allocation2 + $0x74] sm:$0xf]
    %v346 = vld [vmem:[#allocation2 + $0x78] sm:$0xff]
    %v347 = vld [vmem:[#allocation2 + $0x80] sm:$0xf]
    %v348 = vld [vmem:[#allocation2 + $0x84] sm:$0xff]
    %v349 = vld [vmem:[#allocation2 + $0x8c] sm:$0xf]
    %v350 = vld [vmem:[#allocation2 + $0x90] sm:$0xff]
    %v351 = vld [vmem:[#allocation2 + $0x98] sm:$0xf]
    %v352 = vld [vmem:[#allocation2 + $0x9c] sm:$0xff]
    %v353 = vld [vmem:[#allocation2 + $0xa4] sm:$0xf]
    %v354 = vld [vmem:[#allocation2 + $0xa8] sm:$0xff]
    %v355 = vld [vmem:[#allocation2 + $0xb0] sm:$0xf]
    %v356 = vld [vmem:[#allocation2 + $0xb4] sm:$0xff]
    %v357 = vld [vmem:[#allocation2 + $0xbc] sm:$0xf]
    %v358 = vld [vmem:[#allocation2 + $0xc0] sm:$0xff]
    %v359 = vld [vmem:[#allocation2 + $0xc8] sm:$0xf]
    %v360 = vld [vmem:[#allocation2 + $0xcc] sm:$0xff]
    %v361 = vld [vmem:[#allocation2 + $0xd4] sm:$0xf]
    %v362 = vld [vmem:[#allocation2 + $0xd8] sm:$0xff]
    %v363 = vld [vmem:[#allocation2 + $0xe0] sm:$0xf]
    %v364 = vld [vmem:[#allocation2 + $0xe4] sm:$0xff]
    %v365 = vld [vmem:[#allocation2 + $0xec] sm:$0xf]
    %v366 = vld [vmem:[#allocation2 + $0xf0] sm:$0xff]
    %v367 = vld [vmem:[#allocation2 + $0xf8] sm:$0xf]
    %v368 = vld [vmem:[#allocation2 + $0xfc] sm:$0xff]
    %v369 = vld [vmem:[#allocation2 + $0x104] sm:$0xf]
    %v370 = vld [vmem:[#allocation2 + $0x108] sm:$0xff]
    %v371 = vld [vmem:[#allocation2 + $0x110] sm:$0xf]
    %v372 = vld [vmem:[#allocation2 + $0x114] sm:$0xff]
    %v373 = vld [vmem:[#allocation2 + $0x11c] sm:$0xf]
    %v374 = vld [vmem:[#allocation2 + $0x120] sm:$0xff]
    %v375 = vld [vmem:[#allocation2 + $0x128] sm:$0xf]
    %v376 = vld [vmem:[#allocation2 + $0x12c] sm:$0xff]
    %v377 = vld [vmem:[#allocation2 + $0x134] sm:$0xf]
    %v378 = vld [vmem:[#allocation2 + $0x138] sm:$0xff]
    %v379 = vld [vmem:[#allocation2 + $0x140] sm:$0xf]
    %v380 = vld [vmem:[#allocation2 + $0x144] sm:$0xff]
    %v381 = vld [vmem:[#allocation2 + $0x14c] sm:$0xf]
    %v382 = vld [vmem:[#allocation2 + $0x150] sm:$0xff]
    %v383 = vld [vmem:[#allocation2 + $0x158] sm:$0xf]
    %v384 = vld [vmem:[#allocation2 + $0x15c] sm:$0xff]
    %v385 = vld [vmem:[#allocation2 + $0x164] sm:$0xf]
    %v386 = vld [vmem:[#allocation2 + $0x168] sm:$0xff]
    %v387 = vld [vmem:[#allocation2 + $0x170] sm:$0xf]
    %v388 = vld [vmem:[#allocation2 + $0x174] sm:$0xff]
    %v389 = vld [vmem:[#allocation2 + $0x17c] sm:$0xf]
    %v390 = vld [vmem:[#allocation2 + $0x180] sm:$0xff]
    %v391 = vld [vmem:[#allocation2 + $0x188] sm:$0xf]
    %v392 = vld [vmem:[#allocation2 + $0x18c] sm:$0xff]
    %v393 = vld [vmem:[#allocation2 + $0x194] sm:$0xf]
    %v394 = vld [vmem:[#allocation2 + $0x198] sm:$0xff]
    %v395 = vld [vmem:[#allocation2 + $0x1a0] sm:$0xf]
    %v396 = vld [vmem:[#allocation2 + $0x1a4] sm:$0xff]
    %v397 = vld [vmem:[#allocation2 + $0x1ac] sm:$0xf]
    %v398 = vld [vmem:[#allocation2 + $0x1b0] sm:$0xff]
    %v399 = vld [vmem:[#allocation2 + $0x1b8] sm:$0xf]
    %v400 = vld [vmem:[#allocation2 + $0x1bc] sm:$0xff]
    %v401 = vld [vmem:[#allocation2 + $0x1c4] sm:$0xf]
    %v402 = vld [vmem:[#allocation2 + $0x1c8] sm:$0xff]
    %v403 = vld [vmem:[#allocation2 + $0x1d0] sm:$0xf]
    %v404 = vld [vmem:[#allocation2 + $0x1d4] sm:$0xff]
    %v405 = vld [vmem:[#allocation2 + $0x1dc] sm:$0xf]
    %v406 = vld [vmem:[#allocation2 + $0x1e0] sm:$0xff]
    %v407 = vld [vmem:[#allocation2 + $0x1e8] sm:$0xf]
    %v408 = vld [vmem:[#allocation2 + $0x1ec] sm:$0xff]
    %v409 = vld [vmem:[#allocation2 + $0x1f4] sm:$0xf]
    %v410 = vld [vmem:[#allocation2 + $0x1f8] sm:$0xff]
    %v411 = vld [vmem:[#allocation2 + $0x200] sm:$0xf]
    %v412 = vld [vmem:[#allocation2 + $0x204] sm:$0xff]
    %v413 = vld [vmem:[#allocation2 + $0x20c] sm:$0xf]
    %v414 = vld [vmem:[#allocation2 + $0x210] sm:$0xff]
    %v415 = vld [vmem:[#allocation2 + $0x218] sm:$0xf]
    %v416 = vld [vmem:[#allocation2 + $0x21c] sm:$0xff]
    %v417 = vld [vmem:[#allocation2 + $0x224] sm:$0xf]
    %v418 = vld [vmem:[#allocation2 + $0x228] sm:$0xff]
    %v419 = vld [vmem:[#allocation2 + $0x230] sm:$0xf]
    %v420 = vld [vmem:[#allocation2 + $0x234] sm:$0xff]
    %v421 = vld [vmem:[#allocation2 + $0x23c] sm:$0xf]
    %v423 = vlaneseq
    %v424 = vshrl.u32 %v423, 7
    %v425 = vsub.s32 0, %v424
    %v426 = vrot.slane %v40, %v425
    %v427 = vlaneseq
    %v428 = vshrl.u32 %v427, 7
    %v429 = vsub.s32 1, %v428
    %v430 = vrot.slane %v40, %v429
    %v431 = vlaneseq
    %v432 = vshrl.u32 %v431, 7
    %v433 = vsub.s32 2, %v432
    %v434 = vrot.slane %v40, %v433
    %v534 = vunpack.c.l.b16 %v326
    %v535 = vunpack.c.h.b16 %v326
    %v536 = vunpack.c.l.b16 %v327
    %v537 = vunpack.c.l.b16 %v328
    %v538 = vunpack.c.h.b16 %v328
    %v539 = vunpack.c.l.b16 %v329
    %v540 = vunpack.c.l.b16 %v330
    %v541 = vunpack.c.h.b16 %v330
    %v542 = vunpack.c.l.b16 %v331
    %v543 = vunpack.c.l.b16 %v332
    %v544 = vunpack.c.h.b16 %v332
    %v545 = vunpack.c.l.b16 %v333
    %v546 = vunpack.c.l.b16 %v334
    %v547 = vunpack.c.h.b16 %v334
    %v548 = vunpack.c.l.b16 %v335
    %v549 = vunpack.c.l.b16 %v336
    %v550 = vunpack.c.h.b16 %v336
    %v551 = vunpack.c.l.b16 %v337
    %v552 = vunpack.c.l.b16 %v338
    %v553 = vunpack.c.h.b16 %v338
    %v554 = vunpack.c.l.b16 %v339
    %v555 = vunpack.c.l.b16 %v340
    %v556 = vunpack.c.h.b16 %v340
    %v557 = vunpack.c.l.b16 %v341
    %v558 = vunpack.c.l.b16 %v342
    %v559 = vunpack.c.h.b16 %v342
    %v560 = vunpack.c.l.b16 %v343
    %v561 = vunpack.c.l.b16 %v344
    %v562 = vunpack.c.h.b16 %v344
    %v563 = vunpack.c.l.b16 %v345
    %v564 = vunpack.c.l.b16 %v346
    %v565 = vunpack.c.h.b16 %v346
    %v566 = vunpack.c.l.b16 %v347
    %v567 = vunpack.c.l.b16 %v348
    %v568 = vunpack.c.h.b16 %v348
    %v569 = vunpack.c.l.b16 %v349
    %v570 = vunpack.c.l.b16 %v350
    %v571 = vunpack.c.h.b16 %v350
    %v572 = vunpack.c.l.b16 %v351
    %v573 = vunpack.c.l.b16 %v352
    %v574 = vunpack.c.h.b16 %v352
    %v575 = vunpack.c.l.b16 %v353
    %v576 = vunpack.c.l.b16 %v354
    %v577 = vunpack.c.h.b16 %v354
    %v578 = vunpack.c.l.b16 %v355
    %v579 = vunpack.c.l.b16 %v356
    %v580 = vunpack.c.h.b16 %v356
    %v581 = vunpack.c.l.b16 %v357
    %v582 = vunpack.c.l.b16 %v358
    %v583 = vunpack.c.h.b16 %v358
    %v584 = vunpack.c.l.b16 %v359
    %v585 = vunpack.c.l.b16 %v360
    %v586 = vunpack.c.h.b16 %v360
    %v587 = vunpack.c.l.b16 %v361
    %v588 = vunpack.c.l.b16 %v362
    %v589 = vunpack.c.h.b16 %v362
    %v590 = vunpack.c.l.b16 %v363
    %v591 = vunpack.c.l.b16 %v364
    %v592 = vunpack.c.h.b16 %v364
    %v593 = vunpack.c.l.b16 %v365
    %v594 = vunpack.c.l.b16 %v366
    %v595 = vunpack.c.h.b16 %v366
    %v596 = vunpack.c.l.b16 %v367
    %v597 = vunpack.c.l.b16 %v368
    %v598 = vunpack.c.h.b16 %v368
    %v599 = vunpack.c.l.b16 %v369
    %v600 = vunpack.c.l.b16 %v370
    %v601 = vunpack.c.h.b16 %v370
    %v602 = vunpack.c.l.b16 %v371
    %v603 = vunpack.c.l.b16 %v372
    %v604 = vunpack.c.h.b16 %v372
    %v605 = vunpack.c.l.b16 %v373
    %v606 = vunpack.c.l.b16 %v374
    %v607 = vunpack.c.h.b16 %v374
    %v608 = vunpack.c.l.b16 %v375
    %v609 = vunpack.c.l.b16 %v376
    %v610 = vunpack.c.h.b16 %v376
    %v611 = vunpack.c.l.b16 %v377
    %v612 = vunpack.c.l.b16 %v378
    %v613 = vunpack.c.h.b16 %v378
    %v614 = vunpack.c.l.b16 %v379
    %v615 = vunpack.c.l.b16 %v380
    %v616 = vunpack.c.h.b16 %v380
    %v617 = vunpack.c.l.b16 %v381
    %v618 = vunpack.c.l.b16 %v382
    %v619 = vunpack.c.h.b16 %v382
    %v620 = vunpack.c.l.b16 %v383
    %v621 = vunpack.c.l.b16 %v384
    %v622 = vunpack.c.h.b16 %v384
    %v623 = vunpack.c.l.b16 %v385
    %v624 = vunpack.c.l.b16 %v386
    %v625 = vunpack.c.h.b16 %v386
    %v626 = vunpack.c.l.b16 %v387
    %v627 = vunpack.c.l.b16 %v388
    %v628 = vunpack.c.h.b16 %v388
    %v629 = vunpack.c.l.b16 %v389
    %v630 = vunpack.c.l.b16 %v390
    %v631 = vunpack.c.h.b16 %v390
    %v632 = vunpack.c.l.b16 %v391
    %v633 = vunpack.c.l.b16 %v392
    %v634 = vunpack.c.h.b16 %v392
    %v635 = vunpack.c.l.b16 %v393
    %v636 = vunpack.c.l.b16 %v394
    %v637 = vunpack.c.h.b16 %v394
    %v638 = vunpack.c.l.b16 %v395
    %v639 = vunpack.c.l.b16 %v396
    %v640 = vunpack.c.h.b16 %v396
    %v641 = vunpack.c.l.b16 %v397
    %v642 = vunpack.c.l.b16 %v398
    %v643 = vunpack.c.h.b16 %v398
    %v644 = vunpack.c.l.b16 %v399
    %v645 = vunpack.c.l.b16 %v400
    %v646 = vunpack.c.h.b16 %v400
    %v647 = vunpack.c.l.b16 %v401
    %v648 = vunpack.c.l.b16 %v402
    %v649 = vunpack.c.h.b16 %v402
    %v650 = vunpack.c.l.b16 %v403
    %v651 = vunpack.c.l.b16 %v404
    %v652 = vunpack.c.h.b16 %v404
    %v653 = vunpack.c.l.b16 %v405
    %v654 = vunpack.c.l.b16 %v406
    %v655 = vunpack.c.h.b16 %v406
    %v656 = vunpack.c.l.b16 %v407
    %v657 = vunpack.c.l.b16 %v408
    %v658 = vunpack.c.h.b16 %v408
    %v659 = vunpack.c.l.b16 %v409
    %v660 = vunpack.c.l.b16 %v410
    %v661 = vunpack.c.h.b16 %v410
    %v662 = vunpack.c.l.b16 %v411
    %v663 = vunpack.c.l.b16 %v412
    %v664 = vunpack.c.h.b16 %v412
    %v665 = vunpack.c.l.b16 %v413
    %v666 = vunpack.c.l.b16 %v414
    %v667 = vunpack.c.h.b16 %v414
    %v668 = vunpack.c.l.b16 %v415
    %v669 = vunpack.c.l.b16 %v416
    %v670 = vunpack.c.h.b16 %v416
    %v671 = vunpack.c.l.b16 %v417
    %v672 = vunpack.c.l.b16 %v418
    %v673 = vunpack.c.h.b16 %v418
    %v674 = vunpack.c.l.b16 %v419
    %v675 = vunpack.c.l.b16 %v420
    %v676 = vunpack.c.h.b16 %v420
    %v677 = vunpack.c.l.b16 %v421
    %v678 = vpack.c.b16 %v537, %v534
    %v679 = vpack.c.b16 %v538, %v535
    %v680 = vpack.c.b16 %v539, %v536
    %v681 = vpack.c.b16 %v543, %v540
    %v682 = vpack.c.b16 %v544, %v541
    %v683 = vpack.c.b16 %v545, %v542
    %v684 = vpack.c.b16 %v549, %v546
    %v685 = vpack.c.b16 %v550, %v547
    %v686 = vpack.c.b16 %v551, %v548
    %v687 = vpack.c.b16 %v555, %v552
    %v688 = vpack.c.b16 %v556, %v553
    %v689 = vpack.c.b16 %v557, %v554
    %v690 = vpack.c.b16 %v561, %v558
    %v691 = vpack.c.b16 %v562, %v559
    %v692 = vpack.c.b16 %v563, %v560
    %v693 = vpack.c.b16 %v567, %v564
    %v694 = vpack.c.b16 %v568, %v565
    %v695 = vpack.c.b16 %v569, %v566
    %v696 = vpack.c.b16 %v573, %v570
    %v697 = vpack.c.b16 %v574, %v571
    %v698 = vpack.c.b16 %v575, %v572
    %v699 = vpack.c.b16 %v579, %v576
    %v700 = vpack.c.b16 %v580, %v577
    %v701 = vpack.c.b16 %v581, %v578
    %v702 = vpack.c.b16 %v585, %v582
    %v703 = vpack.c.b16 %v586, %v583
    %v704 = vpack.c.b16 %v587, %v584
    %v705 = vpack.c.b16 %v591, %v588
    %v706 = vpack.c.b16 %v592, %v589
    %v707 = vpack.c.b16 %v593, %v590
    %v708 = vpack.c.b16 %v597, %v594
    %v709 = vpack.c.b16 %v598, %v595
    %v710 = vpack.c.b16 %v599, %v596
    %v711 = vpack.c.b16 %v603, %v600
    %v712 = vpack.c.b16 %v604, %v601
    %v713 = vpack.c.b16 %v605, %v602
    %v714 = vpack.c.b16 %v609, %v606
    %v715 = vpack.c.b16 %v610, %v607
    %v716 = vpack.c.b16 %v611, %v608
    %v717 = vpack.c.b16 %v615, %v612
    %v718 = vpack.c.b16 %v616, %v613
    %v719 = vpack.c.b16 %v617, %v614
    %v720 = vpack.c.b16 %v621, %v618
    %v721 = vpack.c.b16 %v622, %v619
    %v722 = vpack.c.b16 %v623, %v620
    %v723 = vpack.c.b16 %v627, %v624
    %v724 = vpack.c.b16 %v628, %v625
    %v725 = vpack.c.b16 %v629, %v626
    %v726 = vpack.c.b16 %v633, %v630
    %v727 = vpack.c.b16 %v634, %v631
    %v728 = vpack.c.b16 %v635, %v632
    %v729 = vpack.c.b16 %v639, %v636
    %v730 = vpack.c.b16 %v640, %v637
    %v731 = vpack.c.b16 %v641, %v638
    %v732 = vpack.c.b16 %v645, %v642
    %v733 = vpack.c.b16 %v646, %v643
    %v734 = vpack.c.b16 %v647, %v644
    %v735 = vpack.c.b16 %v651, %v648
    %v736 = vpack.c.b16 %v652, %v649
    %v737 = vpack.c.b16 %v653, %v650
    %v738 = vpack.c.b16 %v657, %v654
    %v739 = vpack.c.b16 %v658, %v655
    %v740 = vpack.c.b16 %v659, %v656
    %v741 = vpack.c.b16 %v663, %v660
    %v742 = vpack.c.b16 %v664, %v661
    %v743 = vpack.c.b16 %v665, %v662
    %v744 = vpack.c.b16 %v669, %v666
    %v745 = vpack.c.b16 %v670, %v667
    %v746 = vpack.c.b16 %v671, %v668
    %v747 = vpack.c.b16 %v675, %v672
    %v748 = vpack.c.b16 %v676, %v673
    %v749 = vpack.c.b16 %v677, %v674
    %822 = vmatprep.subr.bf16.mxu0 %v679
    %823 = vmatpush1.bf16.msra.mxu0 %v678
    %824 = vmatprep.subr.bf16.mxu0 %v682
    %825 = vmatpush1.bf16.msra.mxu0 %v681
    %826 = vmatprep.subr.bf16.mxu0 %v685
    %827 = vmatpush1.bf16.msra.mxu0 %v684
    %828 = vmatprep.subr.bf16.mxu0 %v688
    %829 = vmatpush1.bf16.msra.mxu0 %v687
    %830 = vmatprep.subr.bf16.mxu0 %v691
    %831 = vmatpush1.bf16.msra.mxu0 %v690
    %832 = vmatprep.subr.bf16.mxu0 %v694
    %833 = vmatpush1.bf16.msra.mxu0 %v693
    %834 = vmatprep.subr.bf16.mxu0 %v697
    %835 = vmatpush1.bf16.msra.mxu0 %v696
    %836 = vmatprep.subr.bf16.mxu0 %v700
    %837 = vmatpush1.bf16.msra.mxu0 %v699
    %838 = vmatprep.subr.bf16.mxu0 %v703
    %839 = vmatpush1.bf16.msra.mxu0 %v702
    %840 = vmatprep.subr.bf16.mxu0 %v706
    %841 = vmatpush1.bf16.msra.mxu0 %v705
    %842 = vmatprep.subr.bf16.mxu0 %v709
    %843 = vmatpush1.bf16.msra.mxu0 %v708
    %844 = vmatprep.subr.bf16.mxu0 %v712
    %845 = vmatpush1.bf16.msra.mxu0 %v711
    %846 = vmatprep.subr.bf16.mxu0 %v715
    %847 = vmatpush1.bf16.msra.mxu0 %v714
    %848 = vmatprep.subr.bf16.mxu0 %v718
    %849 = vmatpush1.bf16.msra.mxu0 %v717
    %850 = vmatprep.subr.bf16.mxu0 %v721
    %851 = vmatpush1.bf16.msra.mxu0 %v720
    %852 = vmatprep.subr.bf16.mxu0 %v724
    %853 = vmatpush1.bf16.msra.mxu0 %v723
    %854 = vmatprep.mubr.bf16.mxu0 %v324
    %855 = vmatmul.mubr.bf16.gmra.mrb[0].mxu0 %v323
    %v856 = vpop.f32.mrb[0].mxu0
    %v857 = vadd.f32 %v426, %v856
    %v858 = vpop.f32.mrb[0].mxu0
    %v859 = vadd.f32 %v430, %v858
    %v860 = vpop.f32.mrb[0].mxu0
    %v861 = vpop.f32.mrb[0].mxu0
    %862 = vdwg.mxu0
    %863 = vmatprep.subr.bf16.mxu0 %v727
    %864 = vmatpush1.bf16.msra.mxu0 %v726
    %865 = vmatprep.subr.bf16.mxu0 %v730
    %866 = vmatpush1.bf16.msra.mxu0 %v729
    %867 = vmatprep.subr.bf16.mxu0 %v733
    %868 = vmatpush1.bf16.msra.mxu0 %v732
    %869 = vmatprep.subr.bf16.mxu0 %v736
    %870 = vmatpush1.bf16.msra.mxu0 %v735
    %871 = vmatprep.subr.bf16.mxu0 %v739
    %872 = vmatpush1.bf16.msra.mxu0 %v738
    %873 = vmatprep.subr.bf16.mxu0 %v742
    %874 = vmatpush1.bf16.msra.mxu0 %v741
    %875 = vmatprep.subr.bf16.mxu0 %v745
    %876 = vmatpush1.bf16.msra.mxu0 %v744
    %877 = vmatprep.subr.bf16.mxu0 %v748
    %878 = vmatpush1.bf16.msra.mxu0 %v747
    %879 = vmatprep.subr.bf16.mxu0 0
    %880 = vmatpush1.bf16.msra.mxu0 0
    %881 = vmatprep.subr.bf16.mxu0 0
    %882 = vmatpush1.bf16.msra.mxu0 0
    %883 = vmatprep.subr.bf16.mxu0 0
    %884 = vmatpush1.bf16.msra.mxu0 0
    %885 = vmatprep.subr.bf16.mxu0 0
    %886 = vmatpush1.bf16.msra.mxu0 0
    %887 = vmatprep.subr.bf16.mxu0 0
    %888 = vmatpush1.bf16.msra.mxu0 0
    %889 = vmatprep.subr.bf16.mxu0 0
    %890 = vmatpush1.bf16.msra.mxu0 0
    %891 = vmatprep.subr.bf16.mxu0 0
    %892 = vmatpush1.bf16.msra.mxu0 0
    %893 = vmatprep.subr.bf16.mxu0 0
    %894 = vmatpush1.bf16.msra.mxu0 0
    %895 = vmatprep.mubr.bf16.mxu0 0
    %896 = vmatmul.mubr.bf16.gmra.mrb[0].mxu0 %v325
    %v897 = vpop.f32.mrb[0].mxu0
    %v898 = vadd.f32 %v857, %v897
    %v899 = vpop.f32.mrb[0].mxu0
    %v900 = vadd.f32 %v859, %v899
    %v901 = vpop.f32.mrb[0].mxu0
    %v902 = vpop.f32.mrb[0].mxu0
    %903 = vdwg.mxu0
    %904 = vmatprep.subr.bf16.mxu0 0
    %905 = vmatpush1.bf16.msra.mxu0 %v680
    %906 = vmatprep.subr.bf16.mxu0 0
    %907 = vmatpush1.bf16.msra.mxu0 %v683
    %908 = vmatprep.subr.bf16.mxu0 0
    %909 = vmatpush1.bf16.msra.mxu0 %v686
    %910 = vmatprep.subr.bf16.mxu0 0
    %911 = vmatpush1.bf16.msra.mxu0 %v689
    %912 = vmatprep.subr.bf16.mxu0 0
    %913 = vmatpush1.bf16.msra.mxu0 %v692
    %914 = vmatprep.subr.bf16.mxu0 0
    %915 = vmatpush1.bf16.msra.mxu0 %v695
    %916 = vmatprep.subr.bf16.mxu0 0
    %917 = vmatpush1.bf16.msra.mxu0 %v698
    %918 = vmatprep.subr.bf16.mxu0 0
    %919 = vmatpush1.bf16.msra.mxu0 %v701
    %920 = vmatprep.subr.bf16.mxu0 0
    %921 = vmatpush1.bf16.msra.mxu0 %v704
    %922 = vmatprep.subr.bf16.mxu0 0
    %923 = vmatpush1.bf16.msra.mxu0 %v707
    %924 = vmatprep.subr.bf16.mxu0 0
    %925 = vmatpush1.bf16.msra.mxu0 %v710
    %926 = vmatprep.subr.bf16.mxu0 0
    %927 = vmatpush1.bf16.msra.mxu0 %v713
    %928 = vmatprep.subr.bf16.mxu0 0
    %929 = vmatpush1.bf16.msra.mxu0 %v716
    %930 = vmatprep.subr.bf16.mxu0 0
    %931 = vmatpush1.bf16.msra.mxu0 %v719
    %932 = vmatprep.subr.bf16.mxu0 0
    %933 = vmatpush1.bf16.msra.mxu0 %v722
    %934 = vmatprep.subr.bf16.mxu0 0
    %935 = vmatpush1.bf16.msra.mxu0 %v725
    %936 = vmatprep.mubr.bf16.mxu0 %v324
    %937 = vmatmul.mubr.bf16.gmra.mrb[0].mxu0 %v323
    %v938 = vpop.f32.mrb[0].mxu0
    %v939 = vadd.f32 %v434, %v938
    %v940 = vpop.f32.mrb[0].mxu0
    %v941 = vpop.f32.mrb[0].mxu0
    %v942 = vpop.f32.mrb[0].mxu0
    %943 = vdwg.mxu0
    %944 = vmatprep.subr.bf16.mxu0 0
    %945 = vmatpush1.bf16.msra.mxu0 %v728
    %946 = vmatprep.subr.bf16.mxu0 0
    %947 = vmatpush1.bf16.msra.mxu0 %v731
    %948 = vmatprep.subr.bf16.mxu0 0
    %949 = vmatpush1.bf16.msra.mxu0 %v734
    %950 = vmatprep.subr.bf16.mxu0 0
    %951 = vmatpush1.bf16.msra.mxu0 %v737
    %952 = vmatprep.subr.bf16.mxu0 0
    %953 = vmatpush1.bf16.msra.mxu0 %v740
    %954 = vmatprep.subr.bf16.mxu0 0
    %955 = vmatpush1.bf16.msra.mxu0 %v743
    %956 = vmatprep.subr.bf16.mxu0 0
    %957 = vmatpush1.bf16.msra.mxu0 %v746
    %958 = vmatprep.subr.bf16.mxu0 0
    %959 = vmatpush1.bf16.msra.mxu0 %v749
    %960 = vmatprep.subr.bf16.mxu0 0
    %961 = vmatpush1.bf16.msra.mxu0 0
    %962 = vmatprep.subr.bf16.mxu0 0
    %963 = vmatpush1.bf16.msra.mxu0 0
    %964 = vmatprep.subr.bf16.mxu0 0
    %965 = vmatpush1.bf16.msra.mxu0 0
    %966 = vmatprep.subr.bf16.mxu0 0
    %967 = vmatpush1.bf16.msra.mxu0 0
    %968 = vmatprep.subr.bf16.mxu0 0
    %969 = vmatpush1.bf16.msra.mxu0 0
    %970 = vmatprep.subr.bf16.mxu0 0
    %971 = vmatpush1.bf16.msra.mxu0 0
    %972 = vmatprep.subr.bf16.mxu0 0
    %973 = vmatpush1.bf16.msra.mxu0 0
    %974 = vmatprep.subr.bf16.mxu0 0
    %975 = vmatpush1.bf16.msra.mxu0 0
    %976 = vmatprep.mubr.bf16.mxu0 0
    %977 = vmatmul.mubr.bf16.gmra.mrb[0].mxu0 %v325
    %v978 = vpop.f32.mrb[0].mxu0
    %v979 = vadd.f32 %v939, %v978
    %v980 = vpop.f32.mrb[0].mxu0
    %v981 = vpop.f32.mrb[0].mxu0
    %v982 = vpop.f32.mrb[0].mxu0
    %983 = vdwg.mxu0
    %v984 = vmax.f32 %v898, 0.0
    %v985 = vmax.f32 %v900, 0.0
    %v986 = vmax.f32 %v979, 0.0
    %v987 = vadd.f32 %v984, %v985
    %v988 = vadd.f32 %v987, %v986
    %v989 = vlaneseq
    %v990 = vshrl.u32 %v989, 7
    %v991 = vsub.s32 0, %v990
    %v992 = vrot.slane %v41, %v991
    %v993 = vadd.f32 %v988, %v992
    %994 = vst [vmem:[#allocation5] sm:$0x3] %v993
    // Predicated region
    $region26: #{shallowkey_forward.1} parent=1 // pred_check
      _
    $region27: #{shallowkey_forward.1} parent=1 // pred_check_branch
      %996 = sbr.rel (0) target = $region29
    $region28: #{shallowkey_forward.1} parent=1 // pred_region
      %s998 = ssub.s32 32, 32
      %999 = vsyncadd [#allocation4], %s998
      %s1001 = sshll.u32 [#allocation5], 4
      %s1002 = int_to_ptr.vmem [resolvable:$true] %s1001
      %1004 = dma.vmem_to_hbm [thread:$0]  %s1002, 32, %s5, [#allocation4]
    $region29: #{shallowkey_forward.1} parent=1 // pred_fallthru
      _
    // Predicated region
    $region30: #{shallowkey_forward.1} parent=1 // pred_check
      _
    $region31: #{shallowkey_forward.1} parent=1 // pred_check_branch
      %1006 = sbr.rel (0) target = $region33
    $region32: #{shallowkey_forward.1} parent=1 // pred_region
      %1007 = dma.done [#allocation4], 32
    $region33: #{shallowkey_forward.1} parent=1 // pred_fallthru
      _
    %1008 = vsyncpa [#allocation3], 1
    %1009 = vsyncpa [#allocation4], 1

</llo_original>
